<compile_context>
chip_gen: v7x
topology: tpu7x:2x2x1
jax: 0.10.0
libtpu: 0.0.40
codegen_flags: <defaults>
</compile_context>

<pallas_src>
import jax
import jax.numpy as jnp
from jax.experimental import pallas as pl
from jax.experimental.pallas import tpu as pltpu

_LANE = 128
_SUBLANE = 8


def _and_gate_kernel(p_ref, x_ref, o_ref):
    # p_ref : (13,) f32 in SMEM, packed as
    #         [w1[0,0..2], w1[1,0..2], b1[0..2], w2[0..2], b2]
    # x_ref : (2, block_rows, 128) f32 in VMEM  -- batch dense on (sublane, lane)
    # o_ref : (block_rows, 128) f32 in VMEM
    x0 = x_ref[0]                  # (block_rows, 128)
    x1 = x_ref[1]                  # (block_rows, 128)

    # fc1 + ReLU: three hidden units, pure VPU broadcast multiply-adds.
    h0 = jnp.maximum(x0 * p_ref[0] + x1 * p_ref[3] + p_ref[6], 0.0)
    h1 = jnp.maximum(x0 * p_ref[1] + x1 * p_ref[4] + p_ref[7], 0.0)
    h2 = jnp.maximum(x0 * p_ref[2] + x1 * p_ref[5] + p_ref[8], 0.0)

    # fc2 + ReLU.
    o_ref[...] = jnp.maximum(
        h0 * p_ref[9] + h1 * p_ref[10] + h2 * p_ref[11] + p_ref[12], 0.0)


def and_gate_forward(x, w1, b1, w2, b2, *, max_block_rows=1024):
    """x: (B, 2) -> (B, 1) float32.  y = relu(relu(x @ w1 + b1) @ w2 + b2)."""
    B = x.shape[0]

    # Pad B to the next multiple of 128 so the row-major reshape below is legal.
    b_pad = -(-B // _LANE) * _LANE
    rows = b_pad // _LANE

    # Pack all 13 parameters into one flat SMEM-resident array.
    params = jnp.concatenate([
        w1.reshape(-1), b1.reshape(-1), w2.reshape(-1), b2.reshape(-1)
    ]).astype(jnp.float32)                               # (13,)

    # Dense repack: (B, 2) -> (2, rows, 128), batch filling sublanes + lanes.
    xf = x.astype(jnp.float32)
    if b_pad != B:
        xf = jnp.pad(xf, ((0, b_pad - B), (0, 0)))
    x_packed = xf.T.reshape(2, rows, _LANE)

    # Block selection: large dense blocks (amortize per-step overhead), but
    # keep >= 2 grid steps when the batch allows it (v7x megacore).  Block
    # rows must be a multiple of 8 unless they span the full row extent.
    if rows <= 2 * _SUBLANE:
        block_rows = rows                                 # single full block
    else:
        block_rows = min(max_block_rows, -(-rows // 2))   # >= 2 grid steps
        block_rows = -(-block_rows // _SUBLANE) * _SUBLANE
    grid = (-(-rows // block_rows),)                      # ragged tail clipped

    y = pl.pallas_call(
        _and_gate_kernel,
        out_shape=jax.ShapeDtypeStruct((rows, _LANE), jnp.float32),
        grid=grid,
        in_specs=[
            pl.BlockSpec(memory_space=pltpu.SMEM),                    # params
            pl.BlockSpec((2, block_rows, _LANE), lambda i: (0, i, 0)),  # x tile
        ],
        out_specs=pl.BlockSpec((block_rows, _LANE), lambda i: (i, 0)),
        compiler_params=pltpu.CompilerParams(
            dimension_semantics=("parallel",)),
    )(params, x_packed)

    # Free row-major reshape back to (B, 1); padded/clipped lanes sliced away.
    return y.reshape(-1)[:B].reshape(B, 1)


def init_params(key):
    """Deterministic init mimicking PyTorch nn.Linear default (U[-1/sqrt(fan_in), +])."""
    k1, k2, k3, k4 = jax.random.split(key, 4)
    bound1 = 1.0 / jnp.sqrt(2.0)   # fc1: fan_in = 2
    bound2 = 1.0 / jnp.sqrt(3.0)   # fc2: fan_in = 3
    w1 = jax.random.uniform(k1, (2, 3), jnp.float32, -bound1, bound1)
    b1 = jax.random.uniform(k2, (1, 3), jnp.float32, -bound1, bound1)
    w2 = jax.random.uniform(k3, (3, 1), jnp.float32, -bound2, bound2)
    b2 = jax.random.uniform(k4, (1, 1), jnp.float32, -bound2, bound2)
    return w1, b1, w2, b2


def _reference(x, w1, b1, w2, b2):
    return jnp.maximum(jnp.maximum(x @ w1 + b1, 0.0) @ w2 + b2, 0.0)


if __name__ == "__main__":
    key = jax.random.PRNGKey(0)
    kx, kp = jax.random.split(key)
    w1, b1, w2, b2 = init_params(kp)

    # Small batch of 2-feature inputs (AND-gate style 0/1 pairs plus noise).
    batch = 8
    x = jax.random.uniform(kx, (batch, 2), jnp.float32, 0.0, 1.0)

    out = jax.block_until_ready(and_gate_forward(x, w1, b1, w2, b2))
    ref = _reference(x, w1, b1, w2, b2)
    assert out.shape == (batch, 1)
    assert jnp.allclose(out, ref, atol=1e-5, rtol=1e-5)

    # Second check: a batch that exercises the multi-step grid, the v7x
    # two-step split, and the clipped (ragged) tail block.
    batch2 = 5000                  # rows = 40 -> block_rows = 24 -> grid = (2,)
    x2 = jax.random.uniform(jax.random.PRNGKey(1), (batch2, 2), jnp.float32,
                            0.0, 1.0)
    out2 = jax.block_until_ready(and_gate_forward(x2, w1, b1, w2, b2))
    ref2 = _reference(x2, w1, b1, w2, b2)
    assert out2.shape == (batch2, 1)
    assert jnp.allclose(out2, ref2, atol=1e-5, rtol=1e-5)

    # Third check: tail-block clipping with a small forced block size.
    batch3 = 300                   # rows = 3, single full block
    x3 = jax.random.uniform(jax.random.PRNGKey(2), (batch3, 2), jnp.float32,
                            0.0, 1.0)
    out3 = jax.block_until_ready(and_gate_forward(x3, w1, b1, w2, b2))
    ref3 = _reference(x3, w1, b1, w2, b2)
    assert out3.shape == (batch3, 1)
    assert jnp.allclose(out3, ref3, atol=1e-5, rtol=1e-5)

    print("KERNEL_OK")
</pallas_src>

<mosaic_0001>
module attributes {stable_mosaic.version = 11 : i64} {
  func.func @_and_gate_kernel(%arg0: i32, %arg1: memref<13xf32, #tpu.memory_space<smem>>, %arg2: memref<2x1x128xf32, #tpu.memory_space<vmem>>, %arg3: memref<1x128xf32, #tpu.memory_space<vmem>>) attributes {dimension_semantics = [#tpu.dimension_semantics<parallel>], iteration_bounds = array<i64: 1>, scalar_prefetch = 0 : i64, scratch_operands = 0 : i64, tpu.core_type = #tpu.core_type<tc>, window_params = [{transform_indices = @transform_0, window_bounds = array<i64: 13>}, {transform_indices = @transform_1, window_bounds = array<i64: 2, 1, 128>}, {transform_indices = @transform_2, window_bounds = array<i64: 1, 128>}]} {
    %c0 = arith.constant 0 : index
    %c0_0 = arith.constant 0 : index
    %c0_1 = arith.constant 0 : index
    %0 = vector.load %arg2[%c0, %c0_0, %c0_1] : memref<2x1x128xf32, #tpu.memory_space<vmem>>, vector<1x1x128xf32>
    %1 = vector.shape_cast %0 : vector<1x1x128xf32> to vector<1x128xf32>
    %c1 = arith.constant 1 : index
    %c0_2 = arith.constant 0 : index
    %c0_3 = arith.constant 0 : index
    %2 = vector.load %arg2[%c1, %c0_2, %c0_3] : memref<2x1x128xf32, #tpu.memory_space<vmem>>, vector<1x1x128xf32>
    %3 = vector.shape_cast %2 : vector<1x1x128xf32> to vector<1x128xf32>
    %c0_4 = arith.constant 0 : index
    %4 = memref.load %arg1[%c0_4] : memref<13xf32, #tpu.memory_space<smem>>
    %5 = vector.broadcast %4 : f32 to vector<1x128xf32>
    %6 = arith.mulf %1, %5 : vector<1x128xf32>
    %c3 = arith.constant 3 : index
    %7 = memref.load %arg1[%c3] : memref<13xf32, #tpu.memory_space<smem>>
    %8 = vector.broadcast %7 : f32 to vector<1x128xf32>
    %9 = arith.mulf %3, %8 : vector<1x128xf32>
    %10 = arith.addf %6, %9 : vector<1x128xf32>
    %c6 = arith.constant 6 : index
    %11 = memref.load %arg1[%c6] : memref<13xf32, #tpu.memory_space<smem>>
    %12 = vector.broadcast %11 : f32 to vector<1x128xf32>
    %13 = arith.addf %10, %12 : vector<1x128xf32>
    %cst = arith.constant 0.000000e+00 : f32
    %14 = vector.broadcast %cst : f32 to vector<1x128xf32>
    %15 = arith.maximumf %13, %14 : vector<1x128xf32>
    %c1_5 = arith.constant 1 : index
    %16 = memref.load %arg1[%c1_5] : memref<13xf32, #tpu.memory_space<smem>>
    %17 = vector.broadcast %16 : f32 to vector<1x128xf32>
    %18 = arith.mulf %1, %17 : vector<1x128xf32>
    %c4 = arith.constant 4 : index
    %19 = memref.load %arg1[%c4] : memref<13xf32, #tpu.memory_space<smem>>
    %20 = vector.broadcast %19 : f32 to vector<1x128xf32>
    %21 = arith.mulf %3, %20 : vector<1x128xf32>
    %22 = arith.addf %18, %21 : vector<1x128xf32>
    %c7 = arith.constant 7 : index
    %23 = memref.load %arg1[%c7] : memref<13xf32, #tpu.memory_space<smem>>
    %24 = vector.broadcast %23 : f32 to vector<1x128xf32>
    %25 = arith.addf %22, %24 : vector<1x128xf32>
    %cst_6 = arith.constant 0.000000e+00 : f32
    %26 = vector.broadcast %cst_6 : f32 to vector<1x128xf32>
    %27 = arith.maximumf %25, %26 : vector<1x128xf32>
    %c2 = arith.constant 2 : index
    %28 = memref.load %arg1[%c2] : memref<13xf32, #tpu.memory_space<smem>>
    %29 = vector.broadcast %28 : f32 to vector<1x128xf32>
    %30 = arith.mulf %1, %29 : vector<1x128xf32>
    %c5 = arith.constant 5 : index
    %31 = memref.load %arg1[%c5] : memref<13xf32, #tpu.memory_space<smem>>
    %32 = vector.broadcast %31 : f32 to vector<1x128xf32>
    %33 = arith.mulf %3, %32 : vector<1x128xf32>
    %34 = arith.addf %30, %33 : vector<1x128xf32>
    %c8 = arith.constant 8 : index
    %35 = memref.load %arg1[%c8] : memref<13xf32, #tpu.memory_space<smem>>
    %36 = vector.broadcast %35 : f32 to vector<1x128xf32>
    %37 = arith.addf %34, %36 : vector<1x128xf32>
    %cst_7 = arith.constant 0.000000e+00 : f32
    %38 = vector.broadcast %cst_7 : f32 to vector<1x128xf32>
    %39 = arith.maximumf %37, %38 : vector<1x128xf32>
    %c9 = arith.constant 9 : index
    %40 = memref.load %arg1[%c9] : memref<13xf32, #tpu.memory_space<smem>>
    %41 = vector.broadcast %40 : f32 to vector<1x128xf32>
    %42 = arith.mulf %15, %41 : vector<1x128xf32>
    %c10 = arith.constant 10 : index
    %43 = memref.load %arg1[%c10] : memref<13xf32, #tpu.memory_space<smem>>
    %44 = vector.broadcast %43 : f32 to vector<1x128xf32>
    %45 = arith.mulf %27, %44 : vector<1x128xf32>
    %46 = arith.addf %42, %45 : vector<1x128xf32>
    %c11 = arith.constant 11 : index
    %47 = memref.load %arg1[%c11] : memref<13xf32, #tpu.memory_space<smem>>
    %48 = vector.broadcast %47 : f32 to vector<1x128xf32>
    %49 = arith.mulf %39, %48 : vector<1x128xf32>
    %50 = arith.addf %46, %49 : vector<1x128xf32>
    %c12 = arith.constant 12 : index
    %51 = memref.load %arg1[%c12] : memref<13xf32, #tpu.memory_space<smem>>
    %52 = vector.broadcast %51 : f32 to vector<1x128xf32>
    %53 = arith.addf %50, %52 : vector<1x128xf32>
    %cst_8 = arith.constant 0.000000e+00 : f32
    %54 = vector.broadcast %cst_8 : f32 to vector<1x128xf32>
    %55 = arith.maximumf %53, %54 : vector<1x128xf32>
    %c0_9 = arith.constant 0 : index
    %c0_10 = arith.constant 0 : index
    %56 = vector.load %arg3[%c0_9, %c0_10] : memref<1x128xf32, #tpu.memory_space<vmem>>, vector<1x128xf32>
    tpu.vector_store %arg3[%c0_9, %c0_10], %55 {strides = array<i32>} : memref<1x128xf32, #tpu.memory_space<vmem>>, vector<1x128xf32>,
    return
  }
  func.func @transform_0(%arg0: i32) -> i32 {
    %c0_i32 = arith.constant 0 : i32
    %c0_i32_0 = arith.constant 0 : i32
    return %c0_i32 : i32
  }
  func.func @transform_1(%arg0: i32) -> (i32, i32, i32) {
    %c0_i32 = arith.constant 0 : i32
    %c0_i32_0 = arith.constant 0 : i32
    %c0_i32_1 = arith.constant 0 : i32
    return %c0_i32, %arg0, %c0_i32_0 : i32, i32, i32
  }
  func.func @transform_2(%arg0: i32) -> (i32, i32) {
    %c0_i32 = arith.constant 0 : i32
    %c0_i32_0 = arith.constant 0 : i32
    return %arg0, %c0_i32 : i32, i32
  }
}

</mosaic_0001>

<llo_original>
// kernel: tpu_custom_call.1
$region0: #{tpu_custom_call.1}
  #allocation0 [shape = 'u32[]', space=smem, size = 0x4, offset = 0x4, fixed_abs, tag = 'smem constant byte address 0x4 - core index']
  #allocation1 [shape = 'u32[144,128]{1,0:T(1,128)}', space=vmem, size = 0x12000, scoped, tag = 'internal scratch']
  %s0 = inlined_call_operand.hbm [shape: f32[13], index: 0, kind: input, shape index: {}]
  %s1 = inlined_call_operand.vmem [shape: f32[2,1,128], index: 1, kind: input, shape index: {}]
  %s2 = inlined_call_operand.hbm [shape: f32[1,128], index: 2, kind: output, shape index: {}]
  %s3 = sld [smem:[#allocation0]]
  $region22: #{tpu_custom_call.1} parent=0
    _
  %s5 = ssub.s32 1, %s3
  %s6 = scalar_select 0, %s5, %s3
  $region1: #{tpu_custom_call.1} parent=0
    #allocation2 [shape = 'u8[512]{0}', space=smem, size = 0x200, scoped, tag = 'input window, operand 0, single buffered']
    #allocation3 [shape = 's32[1]{0}', space=sflag, size = 0x4, scoped, tag = 'scoped memory for tpu_custom_call.1']
    #allocation4 [shape = 's32[1]{0}', space=sflag, size = 0x4, scoped, tag = 'scoped memory for tpu_custom_call.1']
    #allocation5 [shape = 'u8[512]{0}', space=vmem, size = 0x400, scoped, tag = 'output window, operand 0, single buffered']
    %7 = vsyncpa [#allocation4], 0
    %8 = vsyncpa [#allocation3], 0
    // Predicated region
    $region2: #{tpu_custom_call.1} parent=1 // pred_check
      _
    $region3: #{tpu_custom_call.1} parent=1 // pred_check_branch
      %10 = sbr.rel (0) target = $region5
    $region4: #{tpu_custom_call.1} parent=1 // pred_region
      %s12 = ssub.s32 16, 16
      %13 = vsyncadd [#allocation4], %s12
      %16 = dma.hbm_to_smem %s0, 16, [#allocation2], [#allocation4]
    $region5: #{tpu_custom_call.1} parent=1 // pred_fallthru
      _
    // Predicated region
    $region6: #{tpu_custom_call.1} parent=1 // pred_check
      _
    $region7: #{tpu_custom_call.1} parent=1 // pred_check_branch
      %18 = sbr.rel (0) target = $region9
    $region8: #{tpu_custom_call.1} parent=1 // pred_region
      _
    $region9: #{tpu_custom_call.1} parent=1 // pred_fallthru
      _
    // Predicated region
    $region10: #{tpu_custom_call.1} parent=1 // pred_check
      _
    $region11: #{tpu_custom_call.1} parent=1 // pred_check_branch
      %20 = sbr.rel (0) target = $region13
    $region12: #{tpu_custom_call.1} parent=1 // pred_region
      %21 = dma.done [#allocation4], 16
    $region13: #{tpu_custom_call.1} parent=1 // pred_fallthru
      _
    %22 = sfence
    %v23 = vld [vmem:[%s1] sm:$0x1]
    %s24 = scalar_lea.vmem %s1, 1
    %v25 = vld [vmem:[%s24] sm:$0x1]
    %s26 = sld [smem:[#allocation2]]
    %v27 = vstv %s26
    %v28 = vmul.f32 %v23, %v27
    %s29 = sld [smem:[#allocation2 + $0x3]]
    %v30 = vstv %s29
    %v31 = vmul.f32 %v25, %v30
    %v32 = vadd.f32 %v28, %v31
    %s33 = sld [smem:[#allocation2 + $0x6]]
    %v34 = vstv %s33
    %v35 = vadd.f32 %v32, %v34
    %v36 = vmax.f32 %v35, 0.0
    %s37 = sld [smem:[#allocation2 + $0x1]]
    %v38 = vstv %s37
    %v39 = vmul.f32 %v23, %v38
    %s40 = sld [smem:[#allocation2 + $0x4]]
    %v41 = vstv %s40
    %v42 = vmul.f32 %v25, %v41
    %v43 = vadd.f32 %v39, %v42
    %s44 = sld [smem:[#allocation2 + $0x7]]
    %v45 = vstv %s44
    %v46 = vadd.f32 %v43, %v45
    %v47 = vmax.f32 %v46, 0.0
    %s48 = sld [smem:[#allocation2 + $0x2]]
    %v49 = vstv %s48
    %v50 = vmul.f32 %v23, %v49
    %s51 = sld [smem:[#allocation2 + $0x5]]
    %v52 = vstv %s51
    %v53 = vmul.f32 %v25, %v52
    %v54 = vadd.f32 %v50, %v53
    %s55 = sld [smem:[#allocation2 + $0x8]]
    %v56 = vstv %s55
    %v57 = vadd.f32 %v54, %v56
    %v58 = vmax.f32 %v57, 0.0
    %s59 = sld [smem:[#allocation2 + $0x9]]
    %v60 = vstv %s59
    %v61 = vmul.f32 %v36, %v60
    %s62 = sld [smem:[#allocation2 + $0xa]]
    %v63 = vstv %s62
    %v64 = vmul.f32 %v47, %v63
    %v65 = vadd.f32 %v61, %v64
    %s66 = sld [smem:[#allocation2 + $0xb]]
    %v67 = vstv %s66
    %v68 = vmul.f32 %v58, %v67
    %v69 = vadd.f32 %v65, %v68
    %s70 = sld [smem:[#allocation2 + $0xc]]
    %v71 = vstv %s70
    %v72 = vadd.f32 %v69, %v71
    %v73 = vmax.f32 %v72, 0.0
    %74 = vst [vmem:[#allocation5] sm:$0x1] %v73
    // Predicated region
    $region14: #{tpu_custom_call.1} parent=1 // pred_check
      _
    $region15: #{tpu_custom_call.1} parent=1 // pred_check_branch
      %76 = sbr.rel (0) target = $region17
    $region16: #{tpu_custom_call.1} parent=1 // pred_region
      %s78 = ssub.s32 16, 16
      %79 = vsyncadd [#allocation3], %s78
      %s81 = sshll.u32 [#allocation5], 4
      %s82 = int_to_ptr.vmem [resolvable:$true] %s81
      %84 = dma.vmem_to_hbm [thread:$0]  %s82, 16, %s2, [#allocation3]
    $region17: #{tpu_custom_call.1} parent=1 // pred_fallthru
      _
    // Predicated region
    $region18: #{tpu_custom_call.1} parent=1 // pred_check
      _
    $region19: #{tpu_custom_call.1} parent=1 // pred_check_branch
      %86 = sbr.rel (0) target = $region21
    $region20: #{tpu_custom_call.1} parent=1 // pred_region
      %87 = dma.done [#allocation3], 16
    $region21: #{tpu_custom_call.1} parent=1 // pred_fallthru
      _
    %88 = vsyncpa [#allocation3], 1
    %89 = vsyncpa [#allocation4], 1

</llo_original>
